<compile_context>
chip_gen: v5e
topology: v5e:2x2
jax: 0.10.0
libtpu: 0.0.40
codegen_flags: <defaults>
</compile_context>

<pallas_src>
import functools

import jax
import jax.numpy as jnp
from jax import lax
from jax.experimental import pallas as pl
from jax.experimental.pallas import tpu as pltpu


def _round_up(x, m):
    return (x + m - 1) // m * m


def make_cnn_kernel(filter_heights, stride, seq_len, out_channels, p_pad):
    """Fused im2col-conv + bias + ReLU + position-mask + maxpool + dense."""
    filter_heights = tuple(filter_heights)
    fh_max = max(filter_heights)
    n_conv = len(filter_heights)
    C = out_channels
    NC = n_conv * C
    l_outs = tuple((seq_len - fh) // stride + 1 for fh in filter_heights)
    # If every padded position is valid for every filter, no masking needed.
    needs_mask = p_pad > min(l_outs)

    def kernel(x_ref, wf_ref, bf_ref, wd_ref, bd_ref, out_ref):
        x = x_ref[...]                          # [TB, L_need, E] bf16
        TB, _, E = x.shape

        # im2col unfold along the lane axis -> [TB*P_pad, fh_max*E] (K dense).
        chunks = []
        for o in range(fh_max):
            if stride == 1:
                xo = x[:, o:o + p_pad, :]
            else:
                xo = lax.slice(
                    x, (0, o, 0),
                    (TB, o + stride * (p_pad - 1) + 1, E),
                    (1, stride, 1))
            chunks.append(xo)                   # [TB, P_pad, E]
        x_unf = jnp.concatenate(chunks, axis=-1).reshape(TB * p_pad, fh_max * E)

        # One matmul for every filter height / output channel.
        acc = jnp.dot(x_unf, wf_ref[...], preferred_element_type=jnp.float32)
        acc = jnp.maximum(acc + bf_ref[...], 0.0)          # bias + ReLU (f32)
        conv = acc.reshape(TB, p_pad, NC)                  # P_pad % 8 == 0 -> aligned

        if needs_mask:
            # Mask positions past each filter's valid l_out to 0 (post-ReLU, so
            # the max over positions is unaffected: the valid max is >= 0).
            col = lax.broadcasted_iota(jnp.int32, (1, 1, NC), 2)
            thresh = jnp.full((1, 1, NC), l_outs[-1], jnp.int32)
            for i in range(n_conv - 2, -1, -1):
                thresh = jnp.where(col < (i + 1) * C, l_outs[i], thresh)
            pos = lax.broadcasted_iota(jnp.int32, (1, p_pad, 1), 1)
            conv = jnp.where(pos < thresh, conv, 0.0)

        feat = jnp.max(conv, axis=1)                       # [TB, NC] f32

        # Dense layer (dropout == identity at inference); output lane-padded.
        out = jnp.dot(feat.astype(jnp.bfloat16), wd_ref[...],
                      preferred_element_type=jnp.float32) + bd_ref[...]
        out_ref[...] = out

    return kernel


def cnn_forward(texts, params, *, filter_heights, stride, batch_tile=8):
    """texts: int32 [B, L].  Returns [B, num_classes] float32."""
    filter_heights = tuple(filter_heights)
    n_conv = len(filter_heights)

    emb_table = params["embedding"]                       # [V, E]
    E = emb_table.shape[1]
    C = params["conv_b0"].shape[-1]
    num_classes = params["dense_b"].shape[-1]

    # TODO(synk): fuse the embedding gather into the kernel (scalar-prefetch /
    # row-DMA gather) to remove the [B, L, E] HBM round-trip at large batch.
    embedded = emb_table[texts].astype(jnp.bfloat16)      # [B, L, E] bf16
    B, L, _ = embedded.shape

    fh_max = max(filter_heights)
    l_outs = tuple((L - fh) // stride + 1 for fh in filter_heights)
    P = max(l_outs)
    P_pad = _round_up(P, 8)                               # aligned position count
    L_need = (P_pad - 1) * stride + fh_max                # rows every window can read

    TB = batch_tile
    B_pad = _round_up(max(B, TB), TB)

    # Zero-pad input along batch and sequence (padded taps multiply zero weights
    # and/or get masked in the kernel).
    x_pad = jnp.zeros((B_pad, L_need, E), jnp.bfloat16)
    x_pad = x_pad.at[:B, :L, :].set(embedded)

    # Fused, pre-transposed conv weight: [fh_max*E, n_conv*C]; taps o >= fh_i zero.
    NC = n_conv * C
    w_fused = jnp.zeros((fh_max * E, NC), jnp.float32)
    b_fused = jnp.zeros((1, NC), jnp.float32)
    for i, fh in enumerate(filter_heights):
        w = params[f"conv_w{i}"]                          # [C, fh, E]
        blk = jnp.transpose(w, (1, 2, 0)).reshape(fh * E, C)
        w_fused = w_fused.at[: fh * E, i * C:(i + 1) * C].set(blk)
        b_fused = b_fused.at[:, i * C:(i + 1) * C].set(params[f"conv_b{i}"])
    w_fused = w_fused.astype(jnp.bfloat16)

    # Dense weight pre-transposed, output lane-padded to a multiple of 128.
    N_PAD = _round_up(max(num_classes, 128), 128)
    wd = jnp.zeros((NC, N_PAD), jnp.float32)
    wd = wd.at[:, :num_classes].set(params["dense_w"].T).astype(jnp.bfloat16)
    bd = jnp.zeros((1, N_PAD), jnp.float32)
    bd = bd.at[:, :num_classes].set(params["dense_b"])

    kernel = make_cnn_kernel(filter_heights, stride, L, C, P_pad)

    out = pl.pallas_call(
        kernel,
        out_shape=jax.ShapeDtypeStruct((B_pad, N_PAD), jnp.float32),
        grid=(B_pad // TB,),
        in_specs=[
            pl.BlockSpec((TB, L_need, E), lambda b: (b, 0, 0)),     # input tile
            pl.BlockSpec((fh_max * E, NC), lambda b: (0, 0)),       # fused conv W
            pl.BlockSpec((1, NC), lambda b: (0, 0)),                # fused conv b
            pl.BlockSpec((NC, N_PAD), lambda b: (0, 0)),            # dense W^T (padded)
            pl.BlockSpec((1, N_PAD), lambda b: (0, 0)),             # dense b (padded)
        ],
        out_specs=pl.BlockSpec((TB, N_PAD), lambda b: (b, 0)),
        compiler_params=pltpu.CompilerParams(
            dimension_semantics=("parallel",)),
    )(x_pad, w_fused, b_fused, wd, bd)

    return out[:B, :num_classes]


def init_params(key, vocab_size, embed_size, out_channels, filter_heights,
                num_classes, pad_idx):
    keys = jax.random.split(key, 2 * len(filter_heights) + 3)
    params = {}

    emb = 0.02 * jax.random.normal(keys[0], (vocab_size, embed_size), jnp.float32)
    emb = emb.at[pad_idx].set(0.0)            # padding_idx row is zero
    params["embedding"] = emb

    for i, fh in enumerate(filter_heights):
        fan_in = 1 * fh * embed_size
        bound = 1.0 / jnp.sqrt(fan_in)
        params[f"conv_w{i}"] = jax.random.uniform(
            keys[1 + 2 * i], (out_channels, fh, embed_size), jnp.float32,
            minval=-bound, maxval=bound)
        params[f"conv_b{i}"] = jax.random.uniform(
            keys[2 + 2 * i], (1, out_channels), jnp.float32,
            minval=-bound, maxval=bound)

    dense_in = out_channels * len(filter_heights)
    bound = 1.0 / jnp.sqrt(dense_in)
    params["dense_w"] = jax.random.uniform(
        keys[-2], (num_classes, dense_in), jnp.float32, minval=-bound, maxval=bound)
    params["dense_b"] = jax.random.uniform(
        keys[-1], (1, num_classes), jnp.float32, minval=-bound, maxval=bound)
    return params


def reference_forward(texts, params, *, filter_heights, stride):
    """Pure-JAX f32 reference matching the PyTorch forward (eval mode)."""
    emb = params["embedding"][texts]          # [B, L, E]
    B, L, E = emb.shape
    feats = []
    for i, fh in enumerate(filter_heights):
        w = params[f"conv_w{i}"]              # [C, fh, E]
        b = params[f"conv_b{i}"][0]           # [C]
        l_out = (L - fh) // stride + 1
        windows = jnp.stack(
            [emb[:, p * stride: p * stride + fh, :] for p in range(l_out)], axis=1
        )                                     # [B, l_out, fh, E]
        conv = jnp.einsum("bpfe,cfe->bpc", windows, w) + b
        conv = jnp.maximum(conv, 0.0)
        feats.append(jnp.max(conv, axis=1))
    feat_all = jnp.concatenate(feats, axis=1)
    return feat_all @ params["dense_w"].T + params["dense_b"]


if __name__ == "__main__":
    # Small, module-consistent shapes.
    vocab_size = 50
    embed_size = 32
    out_channels = 8
    filter_heights = (2, 3, 4)
    stride = 1
    dropout = 0.5          # identity at inference
    num_classes = 4
    pad_idx = 0
    batch_size = 2
    max_len = 16

    key = jax.random.PRNGKey(0)
    k_params, k_texts = jax.random.split(key)

    params = init_params(k_params, vocab_size, embed_size, out_channels,
                         filter_heights, num_classes, pad_idx)
    texts = jax.random.randint(k_texts, (batch_size, max_len), 0, vocab_size,
                               dtype=jnp.int32)

    fwd = jax.jit(functools.partial(cnn_forward,
                                    filter_heights=filter_heights, stride=stride))
    out = fwd(texts, params)
    out = jax.block_until_ready(out)

    ref = reference_forward(texts, params,
                            filter_heights=filter_heights, stride=stride)
    assert out.shape == (batch_size, num_classes)
    # Tolerance accounts for bf16 matmul operands (f32 accumulation).
    assert jnp.allclose(out, ref, atol=1e-2, rtol=1e-2)

    print("KERNEL_OK")
</pallas_src>

<mosaic_0001>
module attributes {stable_mosaic.version = 11 : i64} {
  func.func @kernel(%arg0: i32, %arg1: memref<8x19x32xbf16, #tpu.memory_space<vmem>>, %arg2: memref<128x24xbf16, #tpu.memory_space<vmem>>, %arg3: memref<1x24xf32, #tpu.memory_space<vmem>>, %arg4: memref<24x128xbf16, #tpu.memory_space<vmem>>, %arg5: memref<1x128xf32, #tpu.memory_space<vmem>>, %arg6: memref<8x128xf32, #tpu.memory_space<vmem>>) attributes {dimension_semantics = [#tpu.dimension_semantics<parallel>], iteration_bounds = array<i64: 1>, scalar_prefetch = 0 : i64, scratch_operands = 0 : i64, tpu.core_type = #tpu.core_type<tc>, window_params = [{transform_indices = @transform_0, window_bounds = array<i64: 8, 19, 32>}, {pipeline_mode = #tpu.pipeline_mode<synchronous>, transform_indices = @transform_1, window_bounds = array<i64: 128, 24>}, {pipeline_mode = #tpu.pipeline_mode<synchronous>, transform_indices = @transform_2, window_bounds = array<i64: 1, 24>}, {pipeline_mode = #tpu.pipeline_mode<synchronous>, transform_indices = @transform_3, window_bounds = array<i64: 24, 128>}, {pipeline_mode = #tpu.pipeline_mode<synchronous>, transform_indices = @transform_4, window_bounds = array<i64: 1, 128>}, {transform_indices = @transform_5, window_bounds = array<i64: 8, 128>}]} {
    %c0 = arith.constant 0 : index
    %c0_0 = arith.constant 0 : index
    %c0_1 = arith.constant 0 : index
    %0 = vector.load %arg1[%c0, %c0_0, %c0_1] : memref<8x19x32xbf16, #tpu.memory_space<vmem>>, vector<8x19x32xbf16>
    %1 = vector.extract_strided_slice %0 {offsets = [0, 0, 0], sizes = [8, 16, 32], strides = [1, 1, 1]} : vector<8x19x32xbf16> to vector<8x16x32xbf16>
    %2 = vector.extract_strided_slice %0 {offsets = [0, 1, 0], sizes = [8, 16, 32], strides = [1, 1, 1]} : vector<8x19x32xbf16> to vector<8x16x32xbf16>
    %3 = vector.extract_strided_slice %0 {offsets = [0, 2, 0], sizes = [8, 16, 32], strides = [1, 1, 1]} : vector<8x19x32xbf16> to vector<8x16x32xbf16>
    %4 = vector.extract_strided_slice %0 {offsets = [0, 3, 0], sizes = [8, 16, 32], strides = [1, 1, 1]} : vector<8x19x32xbf16> to vector<8x16x32xbf16>
    %5 = tpu.concatenate %1, %2, %3, %4 in 2 : vector<8x16x32xbf16>, vector<8x16x32xbf16>, vector<8x16x32xbf16>, vector<8x16x32xbf16> -> vector<8x16x128xbf16>
    %6 = vector.shape_cast %5 : vector<8x16x128xbf16> to vector<128x128xbf16>
    %c0_2 = arith.constant 0 : index
    %c0_3 = arith.constant 0 : index
    %7 = vector.load %arg2[%c0_2, %c0_3] : memref<128x24xbf16, #tpu.memory_space<vmem>>, vector<128x24xbf16>
    %cst = arith.constant dense<0.000000e+00> : vector<128x24xf32>
    %8 = tpu.matmul %6, %7, %cst {dimension_numbers = #tpu.dot_dimension_numbers<[1], [0], [0], [1], [0, 0, 1, 1], [], []>} : vector<128x128xbf16>, vector<128x24xbf16>, vector<128x24xf32> -> vector<128x24xf32>
    %c0_4 = arith.constant 0 : index
    %c0_5 = arith.constant 0 : index
    %9 = vector.load %arg3[%c0_4, %c0_5] : memref<1x24xf32, #tpu.memory_space<vmem>>, vector<1x24xf32>
    %10 = vector.broadcast %9 : vector<1x24xf32> to vector<128x24xf32>
    %11 = arith.addf %8, %10 : vector<128x24xf32>
    %cst_6 = arith.constant 0.000000e+00 : f32
    %12 = vector.broadcast %cst_6 : f32 to vector<128x24xf32>
    %13 = arith.maximumf %11, %12 : vector<128x24xf32>
    %14 = vector.shape_cast %13 : vector<128x24xf32> to vector<8x16x24xf32>
    %15 = tpu.iota {dimensions = array<i32: 2>} : vector<1x1x24xi32>
    %c13_i32 = arith.constant 13 : i32
    %16 = vector.broadcast %c13_i32 : i32 to vector<1x1x24xi32>
    %c16_i32 = arith.constant 16 : i32
    %17 = vector.broadcast %c16_i32 : i32 to vector<1x1x24xi32>
    %18 = arith.cmpi slt, %15, %17 : vector<1x1x24xi32>
    %c14_i32 = arith.constant 14 : i32
    %19 = vector.broadcast %c14_i32 : i32 to vector<1x1x24xi32>
    %20 = arith.select %18, %19, %16 : vector<1x1x24xi1>, vector<1x1x24xi32>
    %c8_i32 = arith.constant 8 : i32
    %21 = vector.broadcast %c8_i32 : i32 to vector<1x1x24xi32>
    %22 = arith.cmpi slt, %15, %21 : vector<1x1x24xi32>
    %c15_i32 = arith.constant 15 : i32
    %23 = vector.broadcast %c15_i32 : i32 to vector<1x1x24xi32>
    %24 = arith.select %22, %23, %20 : vector<1x1x24xi1>, vector<1x1x24xi32>
    %25 = tpu.iota {dimensions = array<i32: 1>} : vector<1x16x1xi32>
    %26 = vector.broadcast %25 : vector<1x16x1xi32> to vector<1x16x24xi32>
    %27 = vector.broadcast %24 : vector<1x1x24xi32> to vector<1x16x24xi32>
    %28 = arith.cmpi slt, %26, %27 : vector<1x16x24xi32>
    %cst_7 = arith.constant 0.000000e+00 : f32
    %29 = vector.shape_cast %28 : vector<1x16x24xi1> to vector<1x16x24xi1>
    %30 = vector.broadcast %29 : vector<1x16x24xi1> to vector<8x16x24xi1>
    %31 = vector.broadcast %cst_7 : f32 to vector<8x16x24xf32>
    %32 = arith.select %30, %14, %31 : vector<8x16x24xi1>, vector<8x16x24xf32>
    %cst_8 = arith.constant dense<0xFF800000> : vector<8x24xf32>
    %33 = vector.multi_reduction <maximumf>, %32, %cst_8 [1] : vector<8x16x24xf32> to vector<8x24xf32>
    %34 = arith.truncf %33 : vector<8x24xf32> to vector<8x24xbf16>
    %c0_9 = arith.constant 0 : index
    %c0_10 = arith.constant 0 : index
    %35 = vector.load %arg4[%c0_9, %c0_10] : memref<24x128xbf16, #tpu.memory_space<vmem>>, vector<24x128xbf16>
    %cst_11 = arith.constant dense<0.000000e+00> : vector<8x128xf32>
    %36 = tpu.matmul %34, %35, %cst_11 {dimension_numbers = #tpu.dot_dimension_numbers<[1], [0], [0], [1], [0, 0, 1, 1], [], []>} : vector<8x24xbf16>, vector<24x128xbf16>, vector<8x128xf32> -> vector<8x128xf32>
    %c0_12 = arith.constant 0 : index
    %c0_13 = arith.constant 0 : index
    %37 = vector.load %arg5[%c0_12, %c0_13] : memref<1x128xf32, #tpu.memory_space<vmem>>, vector<1x128xf32>
    %38 = vector.broadcast %37 : vector<1x128xf32> to vector<8x128xf32>
    %39 = arith.addf %36, %38 : vector<8x128xf32>
    %c0_14 = arith.constant 0 : index
    %c0_15 = arith.constant 0 : index
    %40 = vector.load %arg6[%c0_14, %c0_15] : memref<8x128xf32, #tpu.memory_space<vmem>>, vector<8x128xf32>
    tpu.vector_store %arg6[%c0_14, %c0_15], %39 {strides = array<i32>} : memref<8x128xf32, #tpu.memory_space<vmem>>, vector<8x128xf32>,
    return
  }
  func.func @transform_0(%arg0: i32) -> (i32, i32, i32) {
    %c0_i32 = arith.constant 0 : i32
    %c0_i32_0 = arith.constant 0 : i32
    %c0_i32_1 = arith.constant 0 : i32
    return %arg0, %c0_i32, %c0_i32_0 : i32, i32, i32
  }
  func.func @transform_1(%arg0: i32) -> (i32, i32) {
    %c0_i32 = arith.constant 0 : i32
    %c0_i32_0 = arith.constant 0 : i32
    %c0_i32_1 = arith.constant 0 : i32
    return %c0_i32, %c0_i32_0 : i32, i32
  }
  func.func @transform_2(%arg0: i32) -> (i32, i32) {
    %c0_i32 = arith.constant 0 : i32
    %c0_i32_0 = arith.constant 0 : i32
    %c0_i32_1 = arith.constant 0 : i32
    return %c0_i32, %c0_i32_0 : i32, i32
  }
  func.func @transform_3(%arg0: i32) -> (i32, i32) {
    %c0_i32 = arith.constant 0 : i32
    %c0_i32_0 = arith.constant 0 : i32
    %c0_i32_1 = arith.constant 0 : i32
    return %c0_i32, %c0_i32_0 : i32, i32
  }
  func.func @transform_4(%arg0: i32) -> (i32, i32) {
    %c0_i32 = arith.constant 0 : i32
    %c0_i32_0 = arith.constant 0 : i32
    %c0_i32_1 = arith.constant 0 : i32
    return %c0_i32, %c0_i32_0 : i32, i32
  }
  func.func @transform_5(%arg0: i32) -> (i32, i32) {
    %c0_i32 = arith.constant 0 : i32
    %c0_i32_0 = arith.constant 0 : i32
    return %arg0, %c0_i32 : i32, i32
  }
}

</mosaic_0001>

<llo_original>
// kernel: cnn_forward.1
$region0: #{cnn_forward.1}
  #allocation0 [shape = 'u32[]', space=smem, size = 0x4, offset = 0x4, fixed_abs, tag = 'smem constant byte address 0x4 - core index']
  #allocation1 [shape = 'u32[72,128]{1,0:T(1,128)}', space=vmem, size = 0x9000, scoped, tag = 'internal scratch']
  %s0 = inlined_call_operand.vmem [shape: bf16[8,19,32], index: 0, kind: input, shape index: {}]
  %s1 = inlined_call_operand.vmem [shape: bf16[128,24], index: 1, kind: input, shape index: {}]
  %s2 = inlined_call_operand.vmem [shape: f32[1,24], index: 2, kind: input, shape index: {}]
  %s3 = inlined_call_operand.vmem [shape: bf16[24,128], index: 3, kind: input, shape index: {}]
  %s4 = inlined_call_operand.vmem [shape: f32[1,128], index: 4, kind: input, shape index: {}]
  %s5 = inlined_call_operand.vmem [shape: f32[8,128], index: 5, kind: output, shape index: {}]
  %s6 = sld [smem:[#allocation0]]
  $region30: #{cnn_forward.1} parent=0
    _
  %s8 = ssub.s32 1, %s6
  %s9 = scalar_select 0, %s8, %s6
  // Predicated region
  $region2: #{cnn_forward.1} parent=0 // pred_check
    _
  $region3: #{cnn_forward.1} parent=0 // pred_check_branch
    %11 = sbr.rel (0) target = $region5
  $region4: #{cnn_forward.1} parent=0 // pred_region
    _
  $region5: #{cnn_forward.1} parent=0 // pred_fallthru
    _
  // Predicated region
  $region6: #{cnn_forward.1} parent=0 // pred_check
    _
  $region7: #{cnn_forward.1} parent=0 // pred_check_branch
    %13 = sbr.rel (0) target = $region9
  $region8: #{cnn_forward.1} parent=0 // pred_region
    _
  $region9: #{cnn_forward.1} parent=0 // pred_fallthru
    _
  // Predicated region
  $region10: #{cnn_forward.1} parent=0 // pred_check
    _
  $region11: #{cnn_forward.1} parent=0 // pred_check_branch
    %15 = sbr.rel (0) target = $region13
  $region12: #{cnn_forward.1} parent=0 // pred_region
    _
  $region13: #{cnn_forward.1} parent=0 // pred_fallthru
    _
  // Predicated region
  $region14: #{cnn_forward.1} parent=0 // pred_check
    _
  $region15: #{cnn_forward.1} parent=0 // pred_check_branch
    %17 = sbr.rel (0) target = $region17
  $region16: #{cnn_forward.1} parent=0 // pred_region
    _
  $region17: #{cnn_forward.1} parent=0 // pred_fallthru
    _
  // Predicated region
  $region18: #{cnn_forward.1} parent=0 // pred_check
    _
  $region19: #{cnn_forward.1} parent=0 // pred_check_branch
    %19 = sbr.rel (0) target = $region21
  $region20: #{cnn_forward.1} parent=0 // pred_region
    _
  $region21: #{cnn_forward.1} parent=0 // pred_fallthru
    _
  %v21 = vld [vmem:[%s0] sm:$0xf]
  %v22 = vld [vmem:[%s0 + $0x4] sm:$0xf]
  %v23 = vld [vmem:[%s0 + $0x8] sm:$0x3]
  %v24 = vld [vmem:[%s0 + $0xc] sm:$0xf]
  %v25 = vld [vmem:[%s0 + $0x10] sm:$0xf]
  %v26 = vld [vmem:[%s0 + $0x14] sm:$0x3]
  %v27 = vld [vmem:[%s0 + $0x18] sm:$0xf]
  %v28 = vld [vmem:[%s0 + $0x1c] sm:$0xf]
  %v29 = vld [vmem:[%s0 + $0x20] sm:$0x3]
  %v30 = vld [vmem:[%s0 + $0x24] sm:$0xf]
  %v31 = vld [vmem:[%s0 + $0x28] sm:$0xf]
  %v32 = vld [vmem:[%s0 + $0x2c] sm:$0x3]
  %v33 = vld [vmem:[%s0 + $0x30] sm:$0xf]
  %v34 = vld [vmem:[%s0 + $0x34] sm:$0xf]
  %v35 = vld [vmem:[%s0 + $0x38] sm:$0x3]
  %v36 = vld [vmem:[%s0 + $0x3c] sm:$0xf]
  %v37 = vld [vmem:[%s0 + $0x40] sm:$0xf]
  %v38 = vld [vmem:[%s0 + $0x44] sm:$0x3]
  %v39 = vld [vmem:[%s0 + $0x48] sm:$0xf]
  %v40 = vld [vmem:[%s0 + $0x4c] sm:$0xf]
  %v41 = vld [vmem:[%s0 + $0x50] sm:$0x3]
  %v42 = vld [vmem:[%s0 + $0x54] sm:$0xf]
  %v43 = vld [vmem:[%s0 + $0x58] sm:$0xf]
  %v44 = vld [vmem:[%s0 + $0x5c] sm:$0x3]
  %v61 = vunpack.c.l.b16 %v21
  %v62 = vunpack.c.l.b16 %v22
  %v63 = vunpack.c.l.b16 %v24
  %v64 = vunpack.c.l.b16 %v25
  %v65 = vunpack.c.l.b16 %v27
  %v66 = vunpack.c.l.b16 %v28
  %v67 = vunpack.c.l.b16 %v30
  %v68 = vunpack.c.l.b16 %v31
  %v69 = vunpack.c.l.b16 %v33
  %v70 = vunpack.c.l.b16 %v34
  %v71 = vunpack.c.l.b16 %v36
  %v72 = vunpack.c.l.b16 %v37
  %v73 = vunpack.c.l.b16 %v39
  %v74 = vunpack.c.l.b16 %v40
  %v75 = vunpack.c.l.b16 %v42
  %v76 = vunpack.c.l.b16 %v43
  %v77 = vpack.c.b16 %v62, %v61
  %v78 = vpack.c.b16 %v64, %v63
  %v79 = vpack.c.b16 %v66, %v65
  %v80 = vpack.c.b16 %v68, %v67
  %v81 = vpack.c.b16 %v70, %v69
  %v82 = vpack.c.b16 %v72, %v71
  %v83 = vpack.c.b16 %v74, %v73
  %v84 = vpack.c.b16 %v76, %v75
  %v93 = vunpack.c.l.b16 %v23
  %v94 = vunpack.c.l.b16 %v26
  %v95 = vunpack.c.l.b16 %v29
  %v96 = vunpack.c.l.b16 %v32
  %v97 = vunpack.c.l.b16 %v35
  %v98 = vunpack.c.l.b16 %v38
  %v99 = vunpack.c.l.b16 %v41
  %v100 = vunpack.c.l.b16 %v44
  %v101 = vpack.c.b16 %v93, %v93
  %v102 = vpack.c.b16 %v94, %v94
  %v103 = vpack.c.b16 %v95, %v95
  %v104 = vpack.c.b16 %v96, %v96
  %v105 = vpack.c.b16 %v97, %v97
  %v106 = vpack.c.b16 %v98, %v98
  %v107 = vpack.c.b16 %v99, %v99
  %v108 = vpack.c.b16 %v100, %v100
  %vm109 = vsmask.f32 7424
  %v111 = vshrl.u32 %v77, 16
  %v113 = vshll.u32 %v77, 16
  %v115 = vrot.slane %v113, 1
  %v116 = vor.u32 %v111, %v115
  %v118 = vshll.u32 %v101, 16
  %v120 = vrot.slane %v118, 1
  %v121 = vsel %vm109, %v116, %v120
  %v123 = vshrl.u32 %v78, 16
  %v125 = vshll.u32 %v78, 16
  %v127 = vrot.slane %v125, 1
  %v128 = vor.u32 %v123, %v127
  %v130 = vshll.u32 %v102, 16
  %v132 = vrot.slane %v130, 1
  %v133 = vsel %vm109, %v128, %v132
  %v135 = vshrl.u32 %v79, 16
  %v137 = vshll.u32 %v79, 16
  %v139 = vrot.slane %v137, 1
  %v140 = vor.u32 %v135, %v139
  %v142 = vshll.u32 %v103, 16
  %v144 = vrot.slane %v142, 1
  %v145 = vsel %vm109, %v140, %v144
  %v147 = vshrl.u32 %v80, 16
  %v149 = vshll.u32 %v80, 16
  %v151 = vrot.slane %v149, 1
  %v152 = vor.u32 %v147, %v151
  %v154 = vshll.u32 %v104, 16
  %v156 = vrot.slane %v154, 1
  %v157 = vsel %vm109, %v152, %v156
  %v159 = vshrl.u32 %v81, 16
  %v161 = vshll.u32 %v81, 16
  %v163 = vrot.slane %v161, 1
  %v164 = vor.u32 %v159, %v163
  %v166 = vshll.u32 %v105, 16
  %v168 = vrot.slane %v166, 1
  %v169 = vsel %vm109, %v164, %v168
  %v171 = vshrl.u32 %v82, 16
  %v173 = vshll.u32 %v82, 16
  %v175 = vrot.slane %v173, 1
  %v176 = vor.u32 %v171, %v175
  %v178 = vshll.u32 %v106, 16
  %v180 = vrot.slane %v178, 1
  %v181 = vsel %vm109, %v176, %v180
  %v183 = vshrl.u32 %v83, 16
  %v185 = vshll.u32 %v83, 16
  %v187 = vrot.slane %v185, 1
  %v188 = vor.u32 %v183, %v187
  %v190 = vshll.u32 %v107, 16
  %v192 = vrot.slane %v190, 1
  %v193 = vsel %vm109, %v188, %v192
  %v195 = vshrl.u32 %v84, 16
  %v197 = vshll.u32 %v84, 16
  %v199 = vrot.slane %v197, 1
  %v200 = vor.u32 %v195, %v199
  %v202 = vshll.u32 %v108, 16
  %v204 = vrot.slane %v202, 1
  %v205 = vsel %vm109, %v200, %v204
  %206 = vrot.lane.b32.xlu0 %v121, 32
  %v207 = vpop.permute.xlu0 %206
  %208 = vrot.lane.b32.xlu0 %v133, 32
  %v209 = vpop.permute.xlu0 %208
  %210 = vrot.lane.b32.xlu0 %v145, 32
  %v211 = vpop.permute.xlu0 %210
  %212 = vrot.lane.b32.xlu0 %v157, 32
  %v213 = vpop.permute.xlu0 %212
  %214 = vrot.lane.b32.xlu0 %v169, 32
  %v215 = vpop.permute.xlu0 %214
  %216 = vrot.lane.b32.xlu0 %v181, 32
  %v217 = vpop.permute.xlu0 %216
  %218 = vrot.lane.b32.xlu0 %v193, 32
  %v219 = vpop.permute.xlu0 %218
  %220 = vrot.lane.b32.xlu0 %v205, 32
  %v221 = vpop.permute.xlu0 %220
  %vm222 = vcmask 1046528
  %v223 = vrot.slane %v77, 1
  %v224 = vrot.slane %v101, 1
  %v225 = vsel %vm222, %v223, %v224
  %v226 = vrot.slane %v78, 1
  %v227 = vrot.slane %v102, 1
  %v228 = vsel %vm222, %v226, %v227
  %v229 = vrot.slane %v79, 1
  %v230 = vrot.slane %v103, 1
  %v231 = vsel %vm222, %v229, %v230
  %v232 = vrot.slane %v80, 1
  %v233 = vrot.slane %v104, 1
  %v234 = vsel %vm222, %v232, %v233
  %v235 = vrot.slane %v81, 1
  %v236 = vrot.slane %v105, 1
  %v237 = vsel %vm222, %v235, %v236
  %v238 = vrot.slane %v82, 1
  %v239 = vrot.slane %v106, 1
  %v240 = vsel %vm222, %v238, %v239
  %v241 = vrot.slane %v83, 1
  %v242 = vrot.slane %v107, 1
  %v243 = vsel %vm222, %v241, %v242
  %v244 = vrot.slane %v84, 1
  %v245 = vrot.slane %v108, 1
  %v246 = vsel %vm222, %v244, %v245
  %247 = vrot.lane.b32.xlu0 %v225, 64
  %v248 = vpop.permute.xlu0 %247
  %249 = vrot.lane.b32.xlu0 %v228, 64
  %v250 = vpop.permute.xlu0 %249
  %251 = vrot.lane.b32.xlu0 %v231, 64
  %v252 = vpop.permute.xlu0 %251
  %253 = vrot.lane.b32.xlu0 %v234, 64
  %v254 = vpop.permute.xlu0 %253
  %255 = vrot.lane.b32.xlu0 %v237, 64
  %v256 = vpop.permute.xlu0 %255
  %257 = vrot.lane.b32.xlu0 %v240, 64
  %v258 = vpop.permute.xlu0 %257
  %259 = vrot.lane.b32.xlu0 %v243, 64
  %v260 = vpop.permute.xlu0 %259
  %261 = vrot.lane.b32.xlu0 %v246, 64
  %v262 = vpop.permute.xlu0 %261
  %vm263 = vsmask.f32 6400
  %v264 = vrot.slane %v111, 1
  %v265 = vrot.slane %v113, 2
  %v266 = vor.u32 %v264, %v265
  %v267 = vshrl.u32 %v101, 16
  %v269 = vrot.slane %v267, 1
  %v270 = vrot.slane %v118, 2
  %v271 = vor.u32 %v269, %v270
  %v272 = vsel %vm263, %v266, %v271
  %v273 = vrot.slane %v123, 1
  %v274 = vrot.slane %v125, 2
  %v275 = vor.u32 %v273, %v274
  %v276 = vshrl.u32 %v102, 16
  %v278 = vrot.slane %v276, 1
  %v279 = vrot.slane %v130, 2
  %v280 = vor.u32 %v278, %v279
  %v281 = vsel %vm263, %v275, %v280
  %v282 = vrot.slane %v135, 1
  %v283 = vrot.slane %v137, 2
  %v284 = vor.u32 %v282, %v283
  %v285 = vshrl.u32 %v103, 16
  %v287 = vrot.slane %v285, 1
  %v288 = vrot.slane %v142, 2
  %v289 = vor.u32 %v287, %v288
  %v290 = vsel %vm263, %v284, %v289
  %v291 = vrot.slane %v147, 1
  %v292 = vrot.slane %v149, 2
  %v293 = vor.u32 %v291, %v292
  %v294 = vshrl.u32 %v104, 16
  %v296 = vrot.slane %v294, 1
  %v297 = vrot.slane %v154, 2
  %v298 = vor.u32 %v296, %v297
  %v299 = vsel %vm263, %v293, %v298
  %v300 = vrot.slane %v159, 1
  %v301 = vrot.slane %v161, 2
  %v302 = vor.u32 %v300, %v301
  %v303 = vshrl.u32 %v105, 16
  %v305 = vrot.slane %v303, 1
  %v306 = vrot.slane %v166, 2
  %v307 = vor.u32 %v305, %v306
  %v308 = vsel %vm263, %v302, %v307
  %v309 = vrot.slane %v171, 1
  %v310 = vrot.slane %v173, 2
  %v311 = vor.u32 %v309, %v310
  %v312 = vshrl.u32 %v106, 16
  %v314 = vrot.slane %v312, 1
  %v315 = vrot.slane %v178, 2
  %v316 = vor.u32 %v314, %v315
  %v317 = vsel %vm263, %v311, %v316
  %v318 = vrot.slane %v183, 1
  %v319 = vrot.slane %v185, 2
  %v320 = vor.u32 %v318, %v319
  %v321 = vshrl.u32 %v107, 16
  %v323 = vrot.slane %v321, 1
  %v324 = vrot.slane %v190, 2
  %v325 = vor.u32 %v323, %v324
  %v326 = vsel %vm263, %v320, %v325
  %v327 = vrot.slane %v195, 1
  %v328 = vrot.slane %v197, 2
  %v329 = vor.u32 %v327, %v328
  %v330 = vshrl.u32 %v108, 16
  %v332 = vrot.slane %v330, 1
  %v333 = vrot.slane %v202, 2
  %v334 = vor.u32 %v332, %v333
  %v335 = vsel %vm263, %v329, %v334
  %336 = vrot.lane.b32.xlu0 %v272, 96
  %v337 = vpop.permute.xlu0 %336
  %338 = vrot.lane.b32.xlu0 %v281, 96
  %v339 = vpop.permute.xlu0 %338
  %340 = vrot.lane.b32.xlu0 %v290, 96
  %v341 = vpop.permute.xlu0 %340
  %342 = vrot.lane.b32.xlu0 %v299, 96
  %v343 = vpop.permute.xlu0 %342
  %344 = vrot.lane.b32.xlu0 %v308, 96
  %v345 = vpop.permute.xlu0 %344
  %346 = vrot.lane.b32.xlu0 %v317, 96
  %v347 = vpop.permute.xlu0 %346
  %348 = vrot.lane.b32.xlu0 %v326, 96
  %v349 = vpop.permute.xlu0 %348
  %350 = vrot.lane.b32.xlu0 %v335, 96
  %v351 = vpop.permute.xlu0 %350
  %vm352 = vcmask 261120
  %v354 = vsel %vm352, %v77, %v207
  %v356 = vsel %vm352, %v78, %v209
  %v358 = vsel %vm352, %v79, %v211
  %v360 = vsel %vm352, %v80, %v213
  %v362 = vsel %vm352, %v81, %v215
  %v364 = vsel %vm352, %v82, %v217
  %v366 = vsel %vm352, %v83, %v219
  %v368 = vsel %vm352, %v84, %v221
  %vm369 = vcmask 523264
  %v371 = vsel %vm369, %v354, %v248
  %v373 = vsel %vm369, %v356, %v250
  %v375 = vsel %vm369, %v358, %v252
  %v377 = vsel %vm369, %v360, %v254
  %v379 = vsel %vm369, %v362, %v256
  %v381 = vsel %vm369, %v364, %v258
  %v383 = vsel %vm369, %v366, %v260
  %v385 = vsel %vm369, %v368, %v262
  %vm386 = vcmask 785408
  %v388 = vsel %vm386, %v371, %v337
  %v391 = vsel %vm386, %v373, %v339
  %v394 = vsel %vm386, %v375, %v341
  %v397 = vsel %vm386, %v377, %v343
  %v400 = vsel %vm386, %v379, %v345
  %v403 = vsel %vm386, %v381, %v347
  %v406 = vsel %vm386, %v383, %v349
  %v409 = vsel %vm386, %v385, %v351
  %v411 = vld [vmem:[%s1] sm:$0xf]
  %v412 = vld [vmem:[%s1 + $0x4] sm:$0xf]
  %v413 = vld [vmem:[%s1 + $0x8] sm:$0xf]
  %v414 = vld [vmem:[%s1 + $0xc] sm:$0xf]
  %v415 = vld [vmem:[%s1 + $0x10] sm:$0xf]
  %v416 = vld [vmem:[%s1 + $0x14] sm:$0xf]
  %v417 = vld [vmem:[%s1 + $0x18] sm:$0xf]
  %v418 = vld [vmem:[%s1 + $0x1c] sm:$0xf]
  %v419 = vld [vmem:[%s1 + $0x20] sm:$0xf]
  %v420 = vld [vmem:[%s1 + $0x24] sm:$0xf]
  %v421 = vld [vmem:[%s1 + $0x28] sm:$0xf]
  %v422 = vld [vmem:[%s1 + $0x2c] sm:$0xf]
  %v423 = vld [vmem:[%s1 + $0x30] sm:$0xf]
  %v424 = vld [vmem:[%s1 + $0x34] sm:$0xf]
  %v425 = vld [vmem:[%s1 + $0x38] sm:$0xf]
  %v426 = vld [vmem:[%s1 + $0x3c] sm:$0xf]
  %v427 = vld [vmem:[%s2] sm:$0x1]
  %v429 = vperm.slane %v427, 0
  %v447 = vunpack.c.l.b16 %v411
  %v448 = vunpack.c.l.b16 %v412
  %v449 = vunpack.c.l.b16 %v413
  %v450 = vunpack.c.l.b16 %v414
  %v451 = vunpack.c.l.b16 %v415
  %v452 = vunpack.c.l.b16 %v416
  %v453 = vunpack.c.l.b16 %v417
  %v454 = vunpack.c.l.b16 %v418
  %v455 = vunpack.c.l.b16 %v419
  %v456 = vunpack.c.l.b16 %v420
  %v457 = vunpack.c.l.b16 %v421
  %v458 = vunpack.c.l.b16 %v422
  %v459 = vunpack.c.l.b16 %v423
  %v460 = vunpack.c.l.b16 %v424
  %v461 = vunpack.c.l.b16 %v425
  %v462 = vunpack.c.l.b16 %v426
  %v463 = vpack.c.b16 %v448, %v447
  %v464 = vpack.c.b16 %v450, %v449
  %v465 = vpack.c.b16 %v452, %v451
  %v466 = vpack.c.b16 %v454, %v453
  %v467 = vpack.c.b16 %v456, %v455
  %v468 = vpack.c.b16 %v458, %v457
  %v469 = vpack.c.b16 %v460, %v459
  %v470 = vpack.c.b16 %v462, %v461
  %479 = vmatpush.bf16.msra.mxu0 %v470
  %480 = vmatpush.bf16.msra.mxu0 %v469
  %481 = vmatpush.bf16.msra.mxu0 %v468
  %482 = vmatpush.bf16.msra.mxu0 %v467
  %483 = vmatpush.bf16.msra.mxu0 %v466
  %484 = vmatpush.bf16.msra.mxu0 %v465
  %485 = vmatpush.bf16.msra.mxu0 %v464
  %486 = vmatpush.bf16.msra.mxu0 %v463
  %487 = vmatmul.bf16.gmra.mxu0 %v388
  %v488 = vpop.f32.mrf.mxu0
  %v489 = vadd.f32 %v429, %v488
  %v490 = vpop.f32.mrf.mxu0
  %v491 = vadd.f32 %v429, %v490
  %492 = vmatmul.bf16.gmra.mxu0 %v391
  %v493 = vpop.f32.mrf.mxu0
  %v494 = vadd.f32 %v429, %v493
  %v495 = vpop.f32.mrf.mxu0
  %v496 = vadd.f32 %v429, %v495
  %497 = vmatmul.bf16.gmra.mxu0 %v394
  %v498 = vpop.f32.mrf.mxu0
  %v499 = vadd.f32 %v429, %v498
  %v500 = vpop.f32.mrf.mxu0
  %v501 = vadd.f32 %v429, %v500
  %502 = vmatmul.bf16.gmra.mxu0 %v397
  %v503 = vpop.f32.mrf.mxu0
  %v504 = vadd.f32 %v429, %v503
  %v505 = vpop.f32.mrf.mxu0
  %v506 = vadd.f32 %v429, %v505
  %507 = vmatmul.bf16.gmra.mxu0 %v400
  %v508 = vpop.f32.mrf.mxu0
  %v509 = vadd.f32 %v429, %v508
  %v510 = vpop.f32.mrf.mxu0
  %v511 = vadd.f32 %v429, %v510
  %512 = vmatmul.bf16.gmra.mxu0 %v403
  %v513 = vpop.f32.mrf.mxu0
  %v514 = vadd.f32 %v429, %v513
  %v515 = vpop.f32.mrf.mxu0
  %v516 = vadd.f32 %v429, %v515
  %517 = vmatmul.bf16.gmra.mxu0 %v406
  %v518 = vpop.f32.mrf.mxu0
  %v519 = vadd.f32 %v429, %v518
  %v520 = vpop.f32.mrf.mxu0
  %v521 = vadd.f32 %v429, %v520
  %522 = vmatmul.bf16.gmra.mxu0 %v409
  %v523 = vpop.f32.mrf.mxu0
  %v524 = vadd.f32 %v429, %v523
  %v525 = vpop.f32.mrf.mxu0
  %v526 = vadd.f32 %v429, %v525
  %527 = vdwg.mxu0
  %v528 = vmax.f32 %v489, 0.0
  %v529 = vmax.f32 %v491, 0.0
  %v530 = vmax.f32 %v494, 0.0
  %v531 = vmax.f32 %v496, 0.0
  %v532 = vmax.f32 %v499, 0.0
  %v533 = vmax.f32 %v501, 0.0
  %v534 = vmax.f32 %v504, 0.0
  %v535 = vmax.f32 %v506, 0.0
  %v536 = vmax.f32 %v509, 0.0
  %v537 = vmax.f32 %v511, 0.0
  %v538 = vmax.f32 %v514, 0.0
  %v539 = vmax.f32 %v516, 0.0
  %v540 = vmax.f32 %v519, 0.0
  %v541 = vmax.f32 %v521, 0.0
  %v542 = vmax.f32 %v524, 0.0
  %v543 = vmax.f32 %v526, 0.0
  %v544 = vlaneseq
  %v545 = vand.u32 %v544, 127
  %vm546 = vcmp.lt.s32.totalorder %v545, 16
  %v547 = vsel %vm546, 14, 13
  %vm548 = vcmp.lt.s32.totalorder %v545, 8
  %v549 = vsel %vm548, 15, %v547
  %v550 = vlaneseq
  %v551 = vshrl.u32 %v550, 7
  %v552 = vadd.s32 %v551, 8
  %vm553 = vcmp.lt.s32.totalorder %v551, %v549
  %vm554 = vcmp.lt.s32.totalorder %v552, %v549
  %v555 = vsel %vm553, 1, 0
  %v556 = vsel %vm554, 1, 0
  %vm557 = vcmp.eq.s32.totalorder %v555, 1
  %vm558 = vcmp.eq.s32.totalorder %v556, 1
  %v559 = vsel %vm557, %v528, 0.0
  %v560 = vsel %vm558, %v529, 0.0
  %v561 = vsel %vm557, %v530, 0.0
  %v562 = vsel %vm558, %v531, 0.0
  %v563 = vsel %vm557, %v532, 0.0
  %v564 = vsel %vm558, %v533, 0.0
  %v565 = vsel %vm557, %v534, 0.0
  %v566 = vsel %vm558, %v535, 0.0
  %v567 = vsel %vm557, %v536, 0.0
  %v568 = vsel %vm558, %v537, 0.0
  %v569 = vsel %vm557, %v538, 0.0
  %v570 = vsel %vm558, %v539, 0.0
  %v571 = vsel %vm557, %v540, 0.0
  %v572 = vsel %vm558, %v541, 0.0
  %v573 = vsel %vm557, %v542, 0.0
  %v574 = vsel %vm558, %v543, 0.0
  %vm575 = vcmask 195584
  %v576 = vsel %vm575, %v559, -inf
  %v577 = vsel %vm575, %v560, -inf
  %v578 = vmax.f32 %v576, %v577
  %v579 = vrot.slane %v578, 4
  %v580 = vmax.f32 %v578, %v579
  %v581 = vrot.slane %v580, 2
  %v582 = vmax.f32 %v580, %v581
  %v583 = vrot.slane %v582, 1
  %v584 = vmax.f32 %v582, %v583
  %v585 = vsel %vm575, %v561, -inf
  %v586 = vsel %vm575, %v562, -inf
  %v587 = vmax.f32 %v585, %v586
  %v588 = vrot.slane %v587, 4
  %v589 = vmax.f32 %v587, %v588
  %v590 = vrot.slane %v589, 2
  %v591 = vmax.f32 %v589, %v590
  %v592 = vrot.slane %v591, 1
  %v593 = vmax.f32 %v591, %v592
  %v594 = vsel %vm575, %v563, -inf
  %v595 = vsel %vm575, %v564, -inf
  %v596 = vmax.f32 %v594, %v595
  %v597 = vrot.slane %v596, 4
  %v598 = vmax.f32 %v596, %v597
  %v599 = vrot.slane %v598, 2
  %v600 = vmax.f32 %v598, %v599
  %v601 = vrot.slane %v600, 1
  %v602 = vmax.f32 %v600, %v601
  %v603 = vsel %vm575, %v565, -inf
  %v604 = vsel %vm575, %v566, -inf
  %v605 = vmax.f32 %v603, %v604
  %v606 = vrot.slane %v605, 4
  %v607 = vmax.f32 %v605, %v606
  %v608 = vrot.slane %v607, 2
  %v609 = vmax.f32 %v607, %v608
  %v610 = vrot.slane %v609, 1
  %v611 = vmax.f32 %v609, %v610
  %v612 = vsel %vm575, %v567, -inf
  %v613 = vsel %vm575, %v568, -inf
  %v614 = vmax.f32 %v612, %v613
  %v615 = vrot.slane %v614, 4
  %v616 = vmax.f32 %v614, %v615
  %v617 = vrot.slane %v616, 2
  %v618 = vmax.f32 %v616, %v617
  %v619 = vrot.slane %v618, 1
  %v620 = vmax.f32 %v618, %v619
  %v621 = vsel %vm575, %v569, -inf
  %v622 = vsel %vm575, %v570, -inf
  %v623 = vmax.f32 %v621, %v622
  %v624 = vrot.slane %v623, 4
  %v625 = vmax.f32 %v623, %v624
  %v626 = vrot.slane %v625, 2
  %v627 = vmax.f32 %v625, %v626
  %v628 = vrot.slane %v627, 1
  %v629 = vmax.f32 %v627, %v628
  %v630 = vsel %vm575, %v571, -inf
  %v631 = vsel %vm575, %v572, -inf
  %v632 = vmax.f32 %v630, %v631
  %v633 = vrot.slane %v632, 4
  %v634 = vmax.f32 %v632, %v633
  %v635 = vrot.slane %v634, 2
  %v636 = vmax.f32 %v634, %v635
  %v637 = vrot.slane %v636, 1
  %v638 = vmax.f32 %v636, %v637
  %v639 = vsel %vm575, %v573, -inf
  %v640 = vsel %vm575, %v574, -inf
  %v641 = vmax.f32 %v639, %v640
  %v642 = vrot.slane %v641, 4
  %v643 = vmax.f32 %v641, %v642
  %v644 = vrot.slane %v643, 2
  %v645 = vmax.f32 %v643, %v644
  %v646 = vrot.slane %v645, 1
  %v647 = vmax.f32 %v645, %v646
  %v648 = vpack.c.bf16 %v584, %v584
  %v649 = vpack.c.bf16 %v593, %v593
  %v650 = vpack.c.bf16 %v602, %v602
  %v651 = vpack.c.bf16 %v611, %v611
  %v652 = vpack.c.bf16 %v620, %v620
  %v653 = vpack.c.bf16 %v629, %v629
  %v654 = vpack.c.bf16 %v638, %v638
  %v655 = vpack.c.bf16 %v647, %v647
  %v656 = vld [vmem:[%s3] sm:$0xf]
  %v657 = vld [vmem:[%s3 + $0x4] sm:$0xf]
  %v658 = vld [vmem:[%s3 + $0x8] sm:$0xf]
  %v659 = vld [vmem:[%s4] sm:$0x1]
  %v661 = vperm.slane %v659, 0
  %v671 = vunpack.c.l.b16 %v648
  %v672 = vunpack.c.l.b16 %v649
  %v673 = vunpack.c.l.b16 %v650
  %v674 = vunpack.c.l.b16 %v651
  %v675 = vunpack.c.l.b16 %v652
  %v676 = vunpack.c.l.b16 %v653
  %v677 = vunpack.c.l.b16 %v654
  %v678 = vunpack.c.l.b16 %v655
  %vm679 = vcmask 1041409
  %v680 = vsel %vm679, %v672, %v671
  %vm681 = vcmask 1042434
  %v682 = vsel %vm681, %v673, %v680
  %vm683 = vcmask 1043459
  %v684 = vsel %vm683, %v674, %v682
  %vm685 = vcmask 1044484
  %v686 = vsel %vm685, %v675, %v684
  %vm687 = vcmask 1045509
  %v688 = vsel %vm687, %v676, %v686
  %vm689 = vcmask 1046534
  %v690 = vsel %vm689, %v677, %v688
  %vm691 = vcmask 1047559
  %v692 = vsel %vm691, %v678, %v690
  %v693 = vpack.c.b16 %v692, %v692
  %v697 = vunpack.c.l.b16 %v656
  %v698 = vunpack.c.l.b16 %v657
  %v699 = vunpack.c.l.b16 %v658
  %v700 = vpack.c.b16 %v698, %v697
  %v701 = vpack.c.b16 %v699, %v699
  %v704 = vsel %vm575, %v693, 0
  %vm706 = vcmask 1043456
  %v708 = vsel %vm706, %v701, 0
  %710 = vmatpush.bf16.msra.mxu0 0
  %711 = vmatpush.bf16.msra.mxu0 0
  %712 = vmatpush.bf16.msra.mxu0 0
  %713 = vmatpush.bf16.msra.mxu0 0
  %714 = vmatpush.bf16.msra.mxu0 0
  %715 = vmatpush.bf16.msra.mxu0 0
  %716 = vmatpush.bf16.msra.mxu0 %v708
  %717 = vmatpush.bf16.msra.mxu0 %v700
  %718 = vmatmul.bf16.gmra.mxu0 %v704
  %v719 = vpop.f32.mrf.mxu0
  %v720 = vadd.f32 %v661, %v719
  %v721 = vpop.f32.mrf.mxu0
  %722 = vdwg.mxu0
  %723 = vst [vmem:[%s5] sm:$0xff] %v720
  // Predicated region
  $region22: #{cnn_forward.1} parent=0 // pred_check
    _
  $region23: #{cnn_forward.1} parent=0 // pred_check_branch
    %725 = sbr.rel (0) target = $region25
  $region24: #{cnn_forward.1} parent=0 // pred_region
    _
  $region25: #{cnn_forward.1} parent=0 // pred_fallthru
    _
  // Predicated region
  $region26: #{cnn_forward.1} parent=0 // pred_check
    _
  $region27: #{cnn_forward.1} parent=0 // pred_check_branch
    %727 = sbr.rel (0) target = $region29
  $region28: #{cnn_forward.1} parent=0 // pred_region
    _
  $region29: #{cnn_forward.1} parent=0 // pred_fallthru
    _

</llo_original>
